<compile_context>
chip_gen: v5e
topology: v5e:2x2
jax: 0.10.0
libtpu: 0.0.40
codegen_flags: <defaults>
</compile_context>

<pallas_src>
import functools
import math

import jax
import jax.numpy as jnp
from jax.experimental import pallas as pl
from jax.experimental.pallas import tpu as pltpu


def _round_up(x: int, m: int) -> int:
    return ((x + m - 1) // m) * m


def _device_generation() -> int:
    """Best-effort TPU generation (4/5/6/7); 0 if unknown."""
    try:
        kind = jax.devices()[0].device_kind.lower()
    except Exception:
        return 0
    for token, gen in (("v7", 7), ("v6", 6), ("v5", 5), ("v4", 4)):
        if token in kind:
            return gen
    return 0


def _vmem_budget_bytes() -> int:
    """Generation-aware usable VMEM budget (physical capacity minus headroom)."""
    cap = 0
    try:
        cap = int(getattr(pltpu.get_tpu_info(), "vmem_capacity_bytes", 0))
    except Exception:
        cap = 0
    if cap <= 0:
        cap = (64 << 20) if _device_generation() >= 7 else (128 << 20)
    return cap - max(cap // 8, 4 << 20)  # leave headroom for compiler scratch


def _pick_tm(batch: int, prefer_two_steps: bool) -> int:
    """Largest sublane-aligned batch tile with <=~12.5% padding waste."""
    candidates = (256, 128, 64, 32, 16)
    best = 16
    for tm in candidates:
        pad = _round_up(max(batch, tm), tm) - batch
        if pad * 8 <= max(batch, tm):
            best = tm
            break
    if prefer_two_steps and _round_up(max(batch, best), best) // best < 2:
        # v7x megacore: try to give both TensorCores at least one batch tile.
        for tm in candidates:
            if tm >= best:
                continue
            pad = _round_up(max(batch, tm), tm) - batch
            if pad * 8 <= max(batch, tm) and _round_up(batch, tm) // tm >= 2:
                best = tm
                break
    return best


def _softplus_f32(acc, fast_tail: bool):
    """Numerically stable softplus: max(y,0) + log1p(exp(-|y|)); f32 in/out."""
    neg_abs = -jnp.abs(acc)
    if fast_tail:
        # v6e/v7x: run the transcendental tail on the EUP in bf16 (~2x rate);
        # max / final add stay f32 on the VPU. Small accuracy tradeoff.
        tail = jnp.log1p(jnp.exp(neg_abs.astype(jnp.bfloat16))).astype(jnp.float32)
    else:
        tail = jnp.log1p(jnp.exp(neg_abs))
    return jnp.maximum(acc, 0.0) + tail


def _fused_mlp_kernel(x_ref, w_ref, b_ref, o_ref, *, dims_pad, compute_dtype,
                      fast_softplus):
    """Whole MLP in one grid step (weight slab VMEM-resident, single copy).

    x_ref: (tm, K0)    compute_dtype activation tile, K0 = dims_pad[0]
    w_ref: (L, P, P)   compute_dtype weight slab (whole array in VMEM)
    b_ref: (L, 1, P)   f32 bias slab (whole array in VMEM)
    o_ref: (tm, N_out) f32 output tile, N_out = dims_pad[-1]
    """
    num_layers = len(dims_pad) - 1
    h = x_ref[...]
    for i in range(num_layers):
        kin, nout = dims_pad[i], dims_pad[i + 1]
        # Static, 128-aligned slice of the resident slab: skip zero rows/cols.
        acc = jnp.dot(h.astype(compute_dtype), w_ref[i, :kin, :nout],
                      preferred_element_type=jnp.float32)
        acc = acc + b_ref[i, :, :nout]
        if i < num_layers - 1:
            acc = _softplus_f32(acc, fast_softplus)
        h = acc
    o_ref[...] = h.astype(o_ref.dtype)


def _layer_stream_mlp_kernel(x_ref, w_ref, b_ref, o_ref, h_ref, *, num_layers,
                             n_out, compute_dtype, fast_softplus):
    """Fallback when the slab exceeds VMEM: one layer per grid step.

    Grid is (batch_tiles, L); per-layer weights stream through the default
    double-buffered pipeline, and the activation tile lives in VMEM scratch
    h_ref carried across the innermost ("arbitrary") layer axis.
    """
    layer = pl.program_id(1)
    last = num_layers - 1
    k0 = x_ref.shape[1]
    full = h_ref.shape[1]

    @pl.when(layer == 0)
    def _():
        h_ref[:, :k0] = x_ref[...].astype(jnp.float32)
        if k0 < full:
            h_ref[:, k0:] = jnp.zeros((h_ref.shape[0], full - k0), jnp.float32)

    acc = jnp.dot(h_ref[...].astype(compute_dtype), w_ref[...],
                  preferred_element_type=jnp.float32)
    acc = acc + b_ref[...]

    @pl.when(layer < last)
    def _():
        h_ref[...] = _softplus_f32(acc, fast_softplus)

    @pl.when(layer == last)
    def _():
        o_ref[...] = acc[:, :n_out].astype(o_ref.dtype)


@functools.partial(jax.jit, static_argnames=("dims", "compute_dtype",
                                             "fast_softplus", "force_mode"))
def fc_layer_forward(x, w_stack, b_stack, *, dims, compute_dtype=jnp.bfloat16,
                     fast_softplus=False, force_mode=None):
    """x: (B, in_dim) f32; w_stack: (L, P, P); b_stack: (L, 1, P) f32."""
    B, in_dim = x.shape
    L, P, _ = w_stack.shape
    assert L == len(dims) - 1 and in_dim == dims[0]

    dims_pad = tuple(_round_up(d, 128) for d in dims)
    K0, N_out = dims_pad[0], dims_pad[-1]

    gen = _device_generation()
    tm = _pick_tm(B, prefer_two_steps=(gen >= 7))
    B_pad = _round_up(max(B, tm), tm)
    n_row_tiles = B_pad // tm

    # Pad the input only to K0 (not P); zero padding is exact because the
    # corresponding weight rows are zero.
    x_pad = jnp.zeros((B_pad, K0), compute_dtype)
    x_pad = x_pad.at[:B, :in_dim].set(x.astype(compute_dtype))

    itemsize = jnp.dtype(compute_dtype).itemsize
    w_bytes = w_stack.size * jnp.dtype(w_stack.dtype).itemsize
    b_bytes = b_stack.size * 4
    stream_bytes = 2 * tm * K0 * itemsize + 2 * tm * N_out * 4  # x/out double-buffered
    budget = _vmem_budget_bytes()

    # Resident path cost: weight/bias slab held exactly once (no 2x factor).
    fused_need = w_bytes + b_bytes + stream_bytes + (2 << 20)
    use_fused = fused_need <= budget
    if force_mode == "fused":
        use_fused = True
    elif force_mode == "chunked":
        use_fused = False

    flops = 2 * B_pad * sum(dims_pad[i] * dims_pad[i + 1] for i in range(L))
    transcendentals = 2 * B_pad * sum(dims_pad[1:L])
    cost = pl.CostEstimate(
        flops=flops, transcendentals=transcendentals,
        bytes_accessed=(x_pad.size * itemsize + w_bytes + b_bytes
                        + B_pad * N_out * 4))

    out_shape = jax.ShapeDtypeStruct((B_pad, N_out), jnp.float32)

    if use_fused:
        kernel = functools.partial(_fused_mlp_kernel, dims_pad=dims_pad,
                                   compute_dtype=compute_dtype,
                                   fast_softplus=fast_softplus)
        out = pl.pallas_call(
            kernel,
            out_shape=out_shape,
            grid=(n_row_tiles,),
            in_specs=[
                # Streaming activation tile (default double-buffered pipeline).
                # TODO(synk): raise to pl.Buffered(3) if DMA is ever exposed for
                # very small L*P (review #10).
                pl.BlockSpec((tm, K0), lambda i: (i, 0)),
                # Whole weight/bias slabs placed in VMEM once (single-buffered).
                pl.BlockSpec(memory_space=pltpu.MemorySpace.VMEM),
                pl.BlockSpec(memory_space=pltpu.MemorySpace.VMEM),
            ],
            out_specs=pl.BlockSpec((tm, N_out), lambda i: (i, 0)),
            compiler_params=pltpu.CompilerParams(
                dimension_semantics=("parallel",),
                vmem_limit_bytes=int(budget)),
            cost_estimate=cost,
        )(x_pad, w_stack, b_stack)
    else:
        # Graceful fallback: stream one layer per grid step instead of failing
        # to compile when the slab exceeds the per-generation VMEM budget.
        kernel = functools.partial(_layer_stream_mlp_kernel, num_layers=L,
                                   n_out=N_out, compute_dtype=compute_dtype,
                                   fast_softplus=fast_softplus)
        out = pl.pallas_call(
            kernel,
            out_shape=out_shape,
            grid=(n_row_tiles, L),
            in_specs=[
                pl.BlockSpec((tm, K0), lambda i, l: (i, 0)),
                pl.BlockSpec((None, P, P), lambda i, l: (l, 0, 0)),
                pl.BlockSpec((None, 1, P), lambda i, l: (l, 0, 0)),
            ],
            out_specs=pl.BlockSpec((tm, N_out), lambda i, l: (i, 0)),
            scratch_shapes=[pltpu.VMEM((tm, P), jnp.float32)],
            compiler_params=pltpu.CompilerParams(
                dimension_semantics=("parallel", "arbitrary"),
                vmem_limit_bytes=int(budget)),
            cost_estimate=cost,
        )(x_pad, w_stack, b_stack)

    return out[:B, :dims[-1]]


def xavier_uniform(key, fan_in, fan_out, dtype=jnp.float32):
    """Matches torch.nn.init.xavier_uniform_ (gain=1); stored as (in, out)."""
    limit = math.sqrt(6.0 / (fan_in + fan_out))
    return jax.random.uniform(key, (fan_in, fan_out), dtype=dtype,
                              minval=-limit, maxval=limit)


class FCLayerPallas:
    """JAX/Pallas equivalent of the PyTorch FCLayer (BN_model=None, act=Softplus)."""
    # TODO(synk): BN_model='pre'/'post' (BatchNorm1d) branches are not implemented;
    # only the default BN_model=None path of the reference module is translated.
    # TODO(synk): optional fp8 weight storage for v7x (review #9) not implemented.

    def __init__(self, in_dim, mid_dim, out_dim, num_fc, key, *,
                 compute_dtype=jnp.bfloat16, fast_softplus=False):
        # num_fc Linear layers; the first num_fc-1 are followed by Softplus,
        # the last one (mid_dim -> out_dim) has no activation.
        self.dims = tuple([in_dim] + [mid_dim] * (num_fc - 1) + [out_dim])
        self.num_fc = num_fc
        self.compute_dtype = compute_dtype
        self.fast_softplus = bool(fast_softplus)

        # Common padded slab width (multiple of 128). Per-layer matmuls slice
        # this slab down to round_up(dims[i],128) x round_up(dims[i+1],128).
        self.P = _round_up(max(self.dims), 128)

        keys = jax.random.split(key, num_fc)
        w_stack = jnp.zeros((num_fc, self.P, self.P), jnp.float32)
        b_stack = jnp.zeros((num_fc, 1, self.P), jnp.float32)  # biases init to 0
        for i in range(num_fc):
            w = xavier_uniform(keys[i], self.dims[i], self.dims[i + 1])
            w_stack = w_stack.at[i, :self.dims[i], :self.dims[i + 1]].set(w)
        self.w_stack = w_stack.astype(compute_dtype)  # bf16: MXU-native, half the bytes
        self.b_stack = b_stack                        # bias / bias-add stays f32

    def __call__(self, x, force_mode=None, fast_softplus=None):
        fast = self.fast_softplus if fast_softplus is None else bool(fast_softplus)
        return fc_layer_forward(x, self.w_stack, self.b_stack, dims=self.dims,
                                compute_dtype=self.compute_dtype,
                                fast_softplus=fast, force_mode=force_mode)

    def reference(self, x):
        """Pure-JAX reference with the same bf16-operand / f32-accumulate matmul."""
        h = x.astype(jnp.float32)
        for i in range(self.num_fc):
            w = self.w_stack[i, :self.dims[i], :self.dims[i + 1]].astype(jnp.float32)
            b = self.b_stack[i, 0, :self.dims[i + 1]]
            y = jnp.dot(h.astype(self.compute_dtype).astype(jnp.float32), w) + b
            if i < self.num_fc - 1:
                y = jax.nn.softplus(y)
            h = y
        return h


if __name__ == "__main__":
    key = jax.random.PRNGKey(0)
    k_param, k_x = jax.random.split(key)

    batch, in_dim, mid_dim, out_dim, num_fc = 8, 16, 32, 4, 3
    model = FCLayerPallas(in_dim, mid_dim, out_dim, num_fc, k_param)

    x = jax.random.normal(k_x, (batch, in_dim), jnp.float32)
    y_ref = model.reference(x)

    # 1) Default path: weight slab VMEM-resident, whole MLP in one grid step.
    y = model(x)
    jax.block_until_ready(y)
    assert y.shape == (batch, out_dim), y.shape
    err = float(jnp.max(jnp.abs(y - y_ref)))
    assert err < 1e-2, f"fused path max abs err vs reference = {err}"

    # 2) Layer-streaming fallback (used when the slab exceeds the VMEM budget).
    y_chunked = model(x, force_mode="chunked")
    jax.block_until_ready(y_chunked)
    err_c = float(jnp.max(jnp.abs(y_chunked - y_ref)))
    assert err_c < 1e-2, f"layer-streaming path max abs err vs reference = {err_c}"

    # 3) bf16-EUP Softplus tail (only meaningful on v6e/v7x): looser tolerance
    #    by design (documented accuracy tradeoff).
    if _device_generation() >= 6:
        y_fast = model(x, fast_softplus=True)
        jax.block_until_ready(y_fast)
        err_f = float(jnp.max(jnp.abs(y_fast - y_ref)))
        assert err_f < 7.5e-2, f"fast-softplus path max abs err vs reference = {err_f}"

    print("KERNEL_OK")
</pallas_src>

<mosaic_0001>
module attributes {stable_mosaic.version = 11 : i64} {
  func.func @_fused_mlp_kernel(%arg0: i32, %arg1: memref<16x128xbf16, #tpu.memory_space<vmem>>, %arg2: memref<3x128x128xbf16, #tpu.memory_space<vmem>>, %arg3: memref<3x1x128xf32, #tpu.memory_space<vmem>>, %arg4: memref<16x128xf32, #tpu.memory_space<vmem>>) attributes {dimension_semantics = [#tpu.dimension_semantics<parallel>], iteration_bounds = array<i64: 1>, scalar_prefetch = 0 : i64, scratch_operands = 0 : i64, tpu.core_type = #tpu.core_type<tc>, window_params = [{transform_indices = @transform_0, window_bounds = array<i64: 16, 128>}, {pipeline_mode = #tpu.pipeline_mode<synchronous>, transform_indices = @transform_1, window_bounds = array<i64: 3, 128, 128>}, {pipeline_mode = #tpu.pipeline_mode<synchronous>, transform_indices = @transform_2, window_bounds = array<i64: 3, 1, 128>}, {transform_indices = @transform_3, window_bounds = array<i64: 16, 128>}]} {
    %c0 = arith.constant 0 : index
    %c0_0 = arith.constant 0 : index
    %0 = vector.load %arg1[%c0, %c0_0] : memref<16x128xbf16, #tpu.memory_space<vmem>>, vector<16x128xbf16>
    %c0_1 = arith.constant 0 : index
    %c0_2 = arith.constant 0 : index
    %c0_3 = arith.constant 0 : index
    %1 = vector.load %arg2[%c0_1, %c0_2, %c0_3] : memref<3x128x128xbf16, #tpu.memory_space<vmem>>, vector<1x128x128xbf16>
    %2 = vector.shape_cast %1 : vector<1x128x128xbf16> to vector<128x128xbf16>
    %cst = arith.constant dense<0.000000e+00> : vector<16x128xf32>
    %3 = tpu.matmul %0, %2, %cst {dimension_numbers = #tpu.dot_dimension_numbers<[1], [0], [0], [1], [0, 0, 1, 1], [], []>} : vector<16x128xbf16>, vector<128x128xbf16>, vector<16x128xf32> -> vector<16x128xf32>
    %c0_4 = arith.constant 0 : index
    %c0_5 = arith.constant 0 : index
    %c0_6 = arith.constant 0 : index
    %4 = vector.load %arg3[%c0_4, %c0_5, %c0_6] : memref<3x1x128xf32, #tpu.memory_space<vmem>>, vector<1x1x128xf32>
    %5 = vector.shape_cast %4 : vector<1x1x128xf32> to vector<1x128xf32>
    %6 = vector.broadcast %5 : vector<1x128xf32> to vector<16x128xf32>
    %7 = arith.addf %3, %6 : vector<16x128xf32>
    %8 = math.absf %7 : vector<16x128xf32>
    %cst_7 = arith.constant 0.000000e+00 : f32
    %9 = vector.broadcast %cst_7 : f32 to vector<16x128xf32>
    %10 = arith.subf %9, %8 : vector<16x128xf32>
    %11 = math.exp %10 : vector<16x128xf32>
    %12 = math.log1p %11 : vector<16x128xf32>
    %cst_8 = arith.constant 0.000000e+00 : f32
    %13 = vector.broadcast %cst_8 : f32 to vector<16x128xf32>
    %14 = arith.maximumf %7, %13 : vector<16x128xf32>
    %15 = arith.addf %14, %12 : vector<16x128xf32>
    %16 = arith.truncf %15 : vector<16x128xf32> to vector<16x128xbf16>
    %c1 = arith.constant 1 : index
    %c0_9 = arith.constant 0 : index
    %c0_10 = arith.constant 0 : index
    %17 = vector.load %arg2[%c1, %c0_9, %c0_10] : memref<3x128x128xbf16, #tpu.memory_space<vmem>>, vector<1x128x128xbf16>
    %18 = vector.shape_cast %17 : vector<1x128x128xbf16> to vector<128x128xbf16>
    %cst_11 = arith.constant dense<0.000000e+00> : vector<16x128xf32>
    %19 = tpu.matmul %16, %18, %cst_11 {dimension_numbers = #tpu.dot_dimension_numbers<[1], [0], [0], [1], [0, 0, 1, 1], [], []>} : vector<16x128xbf16>, vector<128x128xbf16>, vector<16x128xf32> -> vector<16x128xf32>
    %c1_12 = arith.constant 1 : index
    %c0_13 = arith.constant 0 : index
    %c0_14 = arith.constant 0 : index
    %20 = vector.load %arg3[%c1_12, %c0_13, %c0_14] : memref<3x1x128xf32, #tpu.memory_space<vmem>>, vector<1x1x128xf32>
    %21 = vector.shape_cast %20 : vector<1x1x128xf32> to vector<1x128xf32>
    %22 = vector.broadcast %21 : vector<1x128xf32> to vector<16x128xf32>
    %23 = arith.addf %19, %22 : vector<16x128xf32>
    %24 = math.absf %23 : vector<16x128xf32>
    %cst_15 = arith.constant 0.000000e+00 : f32
    %25 = vector.broadcast %cst_15 : f32 to vector<16x128xf32>
    %26 = arith.subf %25, %24 : vector<16x128xf32>
    %27 = math.exp %26 : vector<16x128xf32>
    %28 = math.log1p %27 : vector<16x128xf32>
    %cst_16 = arith.constant 0.000000e+00 : f32
    %29 = vector.broadcast %cst_16 : f32 to vector<16x128xf32>
    %30 = arith.maximumf %23, %29 : vector<16x128xf32>
    %31 = arith.addf %30, %28 : vector<16x128xf32>
    %32 = arith.truncf %31 : vector<16x128xf32> to vector<16x128xbf16>
    %c2 = arith.constant 2 : index
    %c0_17 = arith.constant 0 : index
    %c0_18 = arith.constant 0 : index
    %33 = vector.load %arg2[%c2, %c0_17, %c0_18] : memref<3x128x128xbf16, #tpu.memory_space<vmem>>, vector<1x128x128xbf16>
    %34 = vector.shape_cast %33 : vector<1x128x128xbf16> to vector<128x128xbf16>
    %cst_19 = arith.constant dense<0.000000e+00> : vector<16x128xf32>
    %35 = tpu.matmul %32, %34, %cst_19 {dimension_numbers = #tpu.dot_dimension_numbers<[1], [0], [0], [1], [0, 0, 1, 1], [], []>} : vector<16x128xbf16>, vector<128x128xbf16>, vector<16x128xf32> -> vector<16x128xf32>
    %c2_20 = arith.constant 2 : index
    %c0_21 = arith.constant 0 : index
    %c0_22 = arith.constant 0 : index
    %36 = vector.load %arg3[%c2_20, %c0_21, %c0_22] : memref<3x1x128xf32, #tpu.memory_space<vmem>>, vector<1x1x128xf32>
    %37 = vector.shape_cast %36 : vector<1x1x128xf32> to vector<1x128xf32>
    %38 = vector.broadcast %37 : vector<1x128xf32> to vector<16x128xf32>
    %39 = arith.addf %35, %38 : vector<16x128xf32>
    %c0_23 = arith.constant 0 : index
    %c0_24 = arith.constant 0 : index
    %40 = vector.load %arg4[%c0_23, %c0_24] : memref<16x128xf32, #tpu.memory_space<vmem>>, vector<16x128xf32>
    tpu.vector_store %arg4[%c0_23, %c0_24], %39 {strides = array<i32>} : memref<16x128xf32, #tpu.memory_space<vmem>>, vector<16x128xf32>,
    return
  }
  func.func @transform_0(%arg0: i32) -> (i32, i32) {
    %c0_i32 = arith.constant 0 : i32
    %c0_i32_0 = arith.constant 0 : i32
    return %arg0, %c0_i32 : i32, i32
  }
  func.func @transform_1(%arg0: i32) -> (i32, i32, i32) {
    %c0_i32 = arith.constant 0 : i32
    %c0_i32_0 = arith.constant 0 : i32
    %c0_i32_1 = arith.constant 0 : i32
    %c0_i32_2 = arith.constant 0 : i32
    return %c0_i32, %c0_i32_0, %c0_i32_1 : i32, i32, i32
  }
  func.func @transform_2(%arg0: i32) -> (i32, i32, i32) {
    %c0_i32 = arith.constant 0 : i32
    %c0_i32_0 = arith.constant 0 : i32
    %c0_i32_1 = arith.constant 0 : i32
    %c0_i32_2 = arith.constant 0 : i32
    return %c0_i32, %c0_i32_0, %c0_i32_1 : i32, i32, i32
  }
  func.func @transform_3(%arg0: i32) -> (i32, i32) {
    %c0_i32 = arith.constant 0 : i32
    %c0_i32_0 = arith.constant 0 : i32
    return %arg0, %c0_i32 : i32, i32
  }
}

</mosaic_0001>

<llo_original>
// kernel: fc_layer_forward.1
$region0: #{fc_layer_forward.1}
  #allocation0 [shape = 'u32[]', space=smem, size = 0x4, offset = 0x4, fixed_abs, tag = 'smem constant byte address 0x4 - core index']
  #allocation1 [shape = 'u32[72,128]{1,0:T(1,128)}', space=vmem, size = 0x9000, scoped, tag = 'internal scratch']
  %s0 = inlined_call_operand.vmem [shape: bf16[16,128], index: 0, kind: input, shape index: {}]
  %s1 = inlined_call_operand.hbm [shape: bf16[3,128,128], index: 1, kind: input, shape index: {}]
  %s2 = inlined_call_operand.vmem [shape: f32[3,1,128], index: 2, kind: input, shape index: {}]
  %s3 = inlined_call_operand.vmem [shape: f32[16,128], index: 3, kind: output, shape index: {}]
  %s4 = sld [smem:[#allocation0]]
  $region26: #{fc_layer_forward.1} parent=0
    _
  %s6 = ssub.s32 1, %s4
  %s7 = scalar_select 0, %s6, %s4
  $region1: #{fc_layer_forward.1} parent=0
    #allocation2 [shape = 'u8[98304]{0}', space=vmem, size = 0x18000, scoped, tag = 'input window, operand 1, single buffered']
    #allocation3 [shape = 's32[1]{0}', space=sflag, size = 0x4, scoped, tag = 'scoped memory for fc_layer_forward.1']
    %8 = vsyncpa [#allocation3], 0
    // Predicated region
    $region2: #{fc_layer_forward.1} parent=1 // pred_check
      _
    $region3: #{fc_layer_forward.1} parent=1 // pred_check_branch
      %10 = sbr.rel (0) target = $region5
    $region4: #{fc_layer_forward.1} parent=1 // pred_region
      _
    $region5: #{fc_layer_forward.1} parent=1 // pred_fallthru
      _
    // Predicated region
    $region6: #{fc_layer_forward.1} parent=1 // pred_check
      _
    $region7: #{fc_layer_forward.1} parent=1 // pred_check_branch
      %12 = sbr.rel (0) target = $region9
    $region8: #{fc_layer_forward.1} parent=1 // pred_region
      %14 = vsyncadd [#allocation3], 0
      %s15 = sshll.u32 %s1, 4
      %s16 = int_to_ptr.hbm [resolvable:$true] %s15
      %s17 = sshll.u32 [#allocation2], 4
      %s18 = int_to_ptr.vmem [resolvable:$true] %s17
      %23 = dma.hbm_to_vmem [thread:$0]  %s16, 3072, %s18, [#allocation3], 64, 64, 4
    $region9: #{fc_layer_forward.1} parent=1 // pred_fallthru
      _
    // Predicated region
    $region10: #{fc_layer_forward.1} parent=1 // pred_check
      _
    $region11: #{fc_layer_forward.1} parent=1 // pred_check_branch
      %25 = sbr.rel (0) target = $region13
    $region12: #{fc_layer_forward.1} parent=1 // pred_region
      _
    $region13: #{fc_layer_forward.1} parent=1 // pred_fallthru
      _
    // Predicated region
    $region14: #{fc_layer_forward.1} parent=1 // pred_check
      _
    $region15: #{fc_layer_forward.1} parent=1 // pred_check_branch
      %27 = sbr.rel (0) target = $region17
    $region16: #{fc_layer_forward.1} parent=1 // pred_region
      %29 = dma.done [#allocation3], 3072
    $region17: #{fc_layer_forward.1} parent=1 // pred_fallthru
      _
    %v30 = vld [vmem:[%s0] sm:$0xf]
    %v31 = vld [vmem:[%s0 + $0x4] sm:$0xf]
    %v32 = vld [vmem:[#allocation2] sm:$0xf]
    %v33 = vld [vmem:[#allocation2 + $0x4] sm:$0xf]
    %v34 = vld [vmem:[#allocation2 + $0x8] sm:$0xf]
    %v35 = vld [vmem:[#allocation2 + $0xc] sm:$0xf]
    %v36 = vld [vmem:[#allocation2 + $0x10] sm:$0xf]
    %v37 = vld [vmem:[#allocation2 + $0x14] sm:$0xf]
    %v38 = vld [vmem:[#allocation2 + $0x18] sm:$0xf]
    %v39 = vld [vmem:[#allocation2 + $0x1c] sm:$0xf]
    %v40 = vld [vmem:[#allocation2 + $0x20] sm:$0xf]
    %v41 = vld [vmem:[#allocation2 + $0x24] sm:$0xf]
    %v42 = vld [vmem:[#allocation2 + $0x28] sm:$0xf]
    %v43 = vld [vmem:[#allocation2 + $0x2c] sm:$0xf]
    %v44 = vld [vmem:[#allocation2 + $0x30] sm:$0xf]
    %v45 = vld [vmem:[#allocation2 + $0x34] sm:$0xf]
    %v46 = vld [vmem:[#allocation2 + $0x38] sm:$0xf]
    %v47 = vld [vmem:[#allocation2 + $0x3c] sm:$0xf]
    %v48 = vld [vmem:[%s2] sm:$0x1]
    %v50 = vperm.slane %v48, 0
    %v54 = vunpack.c.l.b16 %v30
    %v55 = vunpack.c.l.b16 %v31
    %v56 = vpack.c.b16 %v55, %v54
    %v74 = vunpack.c.l.b16 %v32
    %v75 = vunpack.c.l.b16 %v33
    %v76 = vunpack.c.l.b16 %v34
    %v77 = vunpack.c.l.b16 %v35
    %v78 = vunpack.c.l.b16 %v36
    %v79 = vunpack.c.l.b16 %v37
    %v80 = vunpack.c.l.b16 %v38
    %v81 = vunpack.c.l.b16 %v39
    %v82 = vunpack.c.l.b16 %v40
    %v83 = vunpack.c.l.b16 %v41
    %v84 = vunpack.c.l.b16 %v42
    %v85 = vunpack.c.l.b16 %v43
    %v86 = vunpack.c.l.b16 %v44
    %v87 = vunpack.c.l.b16 %v45
    %v88 = vunpack.c.l.b16 %v46
    %v89 = vunpack.c.l.b16 %v47
    %v90 = vpack.c.b16 %v75, %v74
    %v91 = vpack.c.b16 %v77, %v76
    %v92 = vpack.c.b16 %v79, %v78
    %v93 = vpack.c.b16 %v81, %v80
    %v94 = vpack.c.b16 %v83, %v82
    %v95 = vpack.c.b16 %v85, %v84
    %v96 = vpack.c.b16 %v87, %v86
    %v97 = vpack.c.b16 %v89, %v88
    %106 = vmatpush.bf16.msra.mxu0 %v97
    %107 = vmatpush.bf16.msra.mxu0 %v96
    %108 = vmatpush.bf16.msra.mxu0 %v95
    %109 = vmatpush.bf16.msra.mxu0 %v94
    %110 = vmatpush.bf16.msra.mxu0 %v93
    %111 = vmatpush.bf16.msra.mxu0 %v92
    %112 = vmatpush.bf16.msra.mxu0 %v91
    %113 = vmatpush.bf16.msra.mxu0 %v90
    %114 = vmatmul.bf16.gmra.mxu0 %v56
    %v115 = vpop.f32.mrf.mxu0
    %v116 = vadd.f32 %v50, %v115
    %v117 = vpop.f32.mrf.mxu0
    %v118 = vadd.f32 %v50, %v117
    %119 = vdwg.mxu0
    %v120 = vand.u32 2147483647, %v116
    %v121 = vand.u32 2147483647, %v118
    %v122 = vsub.f32 0.0, %v120
    %v123 = vsub.f32 0.0, %v121
    %v124 = vmul.f32 %v122, 1.442695
    %v125 = vpow.pop %v124
    %v126 = vmul.f32 %v123, 1.442695
    %v127 = vpow.pop %v126
    %v128 = vadd.f32 %v125, 1.0
    %v129 = vlog2.pop %v128
    %v130 = vmul.f32 %v129, 0.6931472
    %v131 = vmul.f32 -0.5, %v125
    %v132 = vadd.f32 %v131, 1.0
    %v133 = vmul.f32 %v132, %v125
    %v134 = vand.u32 2147483647, %v125
    %vm135 = vcmp.lt.f32.partialorder %v134, 0.0004427343
    %v136 = vsel %vm135, %v133, %v130
    %v137 = vadd.f32 %v127, 1.0
    %v138 = vlog2.pop %v137
    %v139 = vmul.f32 %v138, 0.6931472
    %v140 = vmul.f32 -0.5, %v127
    %v141 = vadd.f32 %v140, 1.0
    %v142 = vmul.f32 %v141, %v127
    %v143 = vand.u32 2147483647, %v127
    %vm144 = vcmp.lt.f32.partialorder %v143, 0.0004427343
    %v145 = vsel %vm144, %v142, %v139
    %v146 = vmax.f32 %v116, 0.0
    %v147 = vmax.f32 %v118, 0.0
    %v148 = vadd.f32 %v146, %v136
    %v149 = vadd.f32 %v147, %v145
    %v150 = vpack.c.bf16 %v149, %v148
    %s151 = scalar_lea.vmem [#allocation2], 64
    %v152 = vld [vmem:[%s151] sm:$0xf]
    %v153 = vld [vmem:[%s151 + $0x4] sm:$0xf]
    %v154 = vld [vmem:[%s151 + $0x8] sm:$0xf]
    %v155 = vld [vmem:[%s151 + $0xc] sm:$0xf]
    %v156 = vld [vmem:[%s151 + $0x10] sm:$0xf]
    %v157 = vld [vmem:[%s151 + $0x14] sm:$0xf]
    %v158 = vld [vmem:[%s151 + $0x18] sm:$0xf]
    %v159 = vld [vmem:[%s151 + $0x1c] sm:$0xf]
    %v160 = vld [vmem:[%s151 + $0x20] sm:$0xf]
    %v161 = vld [vmem:[%s151 + $0x24] sm:$0xf]
    %v162 = vld [vmem:[%s151 + $0x28] sm:$0xf]
    %v163 = vld [vmem:[%s151 + $0x2c] sm:$0xf]
    %v164 = vld [vmem:[%s151 + $0x30] sm:$0xf]
    %v165 = vld [vmem:[%s151 + $0x34] sm:$0xf]
    %v166 = vld [vmem:[%s151 + $0x38] sm:$0xf]
    %v167 = vld [vmem:[%s151 + $0x3c] sm:$0xf]
    %s168 = scalar_lea.vmem %s2, 1
    %v169 = vld [vmem:[%s168] sm:$0x1]
    %v171 = vperm.slane %v169, 0
    %v189 = vunpack.c.l.b16 %v152
    %v190 = vunpack.c.l.b16 %v153
    %v191 = vunpack.c.l.b16 %v154
    %v192 = vunpack.c.l.b16 %v155
    %v193 = vunpack.c.l.b16 %v156
    %v194 = vunpack.c.l.b16 %v157
    %v195 = vunpack.c.l.b16 %v158
    %v196 = vunpack.c.l.b16 %v159
    %v197 = vunpack.c.l.b16 %v160
    %v198 = vunpack.c.l.b16 %v161
    %v199 = vunpack.c.l.b16 %v162
    %v200 = vunpack.c.l.b16 %v163
    %v201 = vunpack.c.l.b16 %v164
    %v202 = vunpack.c.l.b16 %v165
    %v203 = vunpack.c.l.b16 %v166
    %v204 = vunpack.c.l.b16 %v167
    %v205 = vpack.c.b16 %v190, %v189
    %v206 = vpack.c.b16 %v192, %v191
    %v207 = vpack.c.b16 %v194, %v193
    %v208 = vpack.c.b16 %v196, %v195
    %v209 = vpack.c.b16 %v198, %v197
    %v210 = vpack.c.b16 %v200, %v199
    %v211 = vpack.c.b16 %v202, %v201
    %v212 = vpack.c.b16 %v204, %v203
    %221 = vmatpush.bf16.msra.mxu0 %v212
    %222 = vmatpush.bf16.msra.mxu0 %v211
    %223 = vmatpush.bf16.msra.mxu0 %v210
    %224 = vmatpush.bf16.msra.mxu0 %v209
    %225 = vmatpush.bf16.msra.mxu0 %v208
    %226 = vmatpush.bf16.msra.mxu0 %v207
    %227 = vmatpush.bf16.msra.mxu0 %v206
    %228 = vmatpush.bf16.msra.mxu0 %v205
    %229 = vmatmul.bf16.gmra.mxu0 %v150
    %v230 = vpop.f32.mrf.mxu0
    %v231 = vadd.f32 %v171, %v230
    %v232 = vpop.f32.mrf.mxu0
    %v233 = vadd.f32 %v171, %v232
    %234 = vdwg.mxu0
    %v235 = vand.u32 2147483647, %v231
    %v236 = vand.u32 2147483647, %v233
    %v237 = vsub.f32 0.0, %v235
    %v238 = vsub.f32 0.0, %v236
    %v239 = vmul.f32 %v237, 1.442695
    %v240 = vpow.pop %v239
    %v241 = vmul.f32 %v238, 1.442695
    %v242 = vpow.pop %v241
    %v243 = vadd.f32 %v240, 1.0
    %v244 = vlog2.pop %v243
    %v245 = vmul.f32 %v244, 0.6931472
    %v246 = vmul.f32 -0.5, %v240
    %v247 = vadd.f32 %v246, 1.0
    %v248 = vmul.f32 %v247, %v240
    %v249 = vand.u32 2147483647, %v240
    %vm250 = vcmp.lt.f32.partialorder %v249, 0.0004427343
    %v251 = vsel %vm250, %v248, %v245
    %v252 = vadd.f32 %v242, 1.0
    %v253 = vlog2.pop %v252
    %v254 = vmul.f32 %v253, 0.6931472
    %v255 = vmul.f32 -0.5, %v242
    %v256 = vadd.f32 %v255, 1.0
    %v257 = vmul.f32 %v256, %v242
    %v258 = vand.u32 2147483647, %v242
    %vm259 = vcmp.lt.f32.partialorder %v258, 0.0004427343
    %v260 = vsel %vm259, %v257, %v254
    %v261 = vmax.f32 %v231, 0.0
    %v262 = vmax.f32 %v233, 0.0
    %v263 = vadd.f32 %v261, %v251
    %v264 = vadd.f32 %v262, %v260
    %v265 = vpack.c.bf16 %v264, %v263
    %s266 = scalar_lea.vmem [#allocation2], 128
    %v267 = vld [vmem:[%s266] sm:$0xf]
    %v268 = vld [vmem:[%s266 + $0x4] sm:$0xf]
    %v269 = vld [vmem:[%s266 + $0x8] sm:$0xf]
    %v270 = vld [vmem:[%s266 + $0xc] sm:$0xf]
    %v271 = vld [vmem:[%s266 + $0x10] sm:$0xf]
    %v272 = vld [vmem:[%s266 + $0x14] sm:$0xf]
    %v273 = vld [vmem:[%s266 + $0x18] sm:$0xf]
    %v274 = vld [vmem:[%s266 + $0x1c] sm:$0xf]
    %v275 = vld [vmem:[%s266 + $0x20] sm:$0xf]
    %v276 = vld [vmem:[%s266 + $0x24] sm:$0xf]
    %v277 = vld [vmem:[%s266 + $0x28] sm:$0xf]
    %v278 = vld [vmem:[%s266 + $0x2c] sm:$0xf]
    %v279 = vld [vmem:[%s266 + $0x30] sm:$0xf]
    %v280 = vld [vmem:[%s266 + $0x34] sm:$0xf]
    %v281 = vld [vmem:[%s266 + $0x38] sm:$0xf]
    %v282 = vld [vmem:[%s266 + $0x3c] sm:$0xf]
    %s283 = scalar_lea.vmem %s2, 2
    %v284 = vld [vmem:[%s283] sm:$0x1]
    %v286 = vperm.slane %v284, 0
    %v304 = vunpack.c.l.b16 %v267
    %v305 = vunpack.c.l.b16 %v268
    %v306 = vunpack.c.l.b16 %v269
    %v307 = vunpack.c.l.b16 %v270
    %v308 = vunpack.c.l.b16 %v271
    %v309 = vunpack.c.l.b16 %v272
    %v310 = vunpack.c.l.b16 %v273
    %v311 = vunpack.c.l.b16 %v274
    %v312 = vunpack.c.l.b16 %v275
    %v313 = vunpack.c.l.b16 %v276
    %v314 = vunpack.c.l.b16 %v277
    %v315 = vunpack.c.l.b16 %v278
    %v316 = vunpack.c.l.b16 %v279
    %v317 = vunpack.c.l.b16 %v280
    %v318 = vunpack.c.l.b16 %v281
    %v319 = vunpack.c.l.b16 %v282
    %v320 = vpack.c.b16 %v305, %v304
    %v321 = vpack.c.b16 %v307, %v306
    %v322 = vpack.c.b16 %v309, %v308
    %v323 = vpack.c.b16 %v311, %v310
    %v324 = vpack.c.b16 %v313, %v312
    %v325 = vpack.c.b16 %v315, %v314
    %v326 = vpack.c.b16 %v317, %v316
    %v327 = vpack.c.b16 %v319, %v318
    %336 = vmatpush.bf16.msra.mxu0 %v327
    %337 = vmatpush.bf16.msra.mxu0 %v326
    %338 = vmatpush.bf16.msra.mxu0 %v325
    %339 = vmatpush.bf16.msra.mxu0 %v324
    %340 = vmatpush.bf16.msra.mxu0 %v323
    %341 = vmatpush.bf16.msra.mxu0 %v322
    %342 = vmatpush.bf16.msra.mxu0 %v321
    %343 = vmatpush.bf16.msra.mxu0 %v320
    %344 = vmatmul.bf16.gmra.mxu0 %v265
    %v345 = vpop.f32.mrf.mxu0
    %v346 = vadd.f32 %v286, %v345
    %v347 = vpop.f32.mrf.mxu0
    %v348 = vadd.f32 %v286, %v347
    %349 = vdwg.mxu0
    %350 = vst [vmem:[%s3] sm:$0xff] %v346
    %351 = vst [vmem:[%s3 + $0x8] sm:$0xff] %v348
    // Predicated region
    $region18: #{fc_layer_forward.1} parent=1 // pred_check
      _
    $region19: #{fc_layer_forward.1} parent=1 // pred_check_branch
      %353 = sbr.rel (0) target = $region21
    $region20: #{fc_layer_forward.1} parent=1 // pred_region
      _
    $region21: #{fc_layer_forward.1} parent=1 // pred_fallthru
      _
    // Predicated region
    $region22: #{fc_layer_forward.1} parent=1 // pred_check
      _
    $region23: #{fc_layer_forward.1} parent=1 // pred_check_branch
      %355 = sbr.rel (0) target = $region25
    $region24: #{fc_layer_forward.1} parent=1 // pred_region
      _
    $region25: #{fc_layer_forward.1} parent=1 // pred_fallthru
      _
    %356 = vsyncpa [#allocation3], 1

</llo_original>
